<compile_context>
chip_gen: v6e
topology: v6e:2x2x1
jax: 0.10.0
libtpu: 0.0.40
codegen_flags: <defaults>
</compile_context>

<pallas_src>
import jax
import jax.numpy as jnp
from jax import lax
from jax.experimental import pallas as pl
from jax.experimental.pallas import tpu as pltpu

NUM_CLASSES = 2
TILE_CAP = 2048          # max batch rows per tile (VMEM / per-step-overhead sweet spot)


def _round_up(n, m):
    return ((n + m - 1) // m) * m


def classifier_kernel(bias_smem, meta_ref, x_ref, wt_ref, probs_ref, loss_ref):
    """One batch tile: logits -> softmax -> CE(softmax) partial loss.

    bias_smem: (2,)        f32 SMEM                      (classifier bias)
    meta_ref:  (tb, 2)     f32 VMEM tile  [:,0]=valid, [:,1]=label*valid
    x_ref:     (tb, H)     VMEM tile      (pooler output, f32 or bf16)
    wt_ref:    (2, H)      VMEM resident  (classifier weight, transposed)
    probs_ref: (tb, 2)     f32 VMEM output tile
    loss_ref:  (1, 1, 1)   f32 per-core resident partial-loss accumulator
    """
    j = pl.program_id(1)                      # inner ("arbitrary") tile axis

    # ---- logits on the VPU/XLU (skip the MXU: only 2 useful columns) ------
    x = x_ref[...].astype(jnp.float32)                               # (tb, H)
    w0 = wt_ref[0:1, :].astype(jnp.float32)                          # (1, H)
    w1 = wt_ref[1:2, :].astype(jnp.float32)                          # (1, H)
    l0 = jnp.sum(x * w0, axis=1, keepdims=True) + bias_smem[0]       # (tb, 1)
    l1 = jnp.sum(x * w1, axis=1, keepdims=True) + bias_smem[1]       # (tb, 1)

    # ---- 2-class softmax via sigmoid identity (one EUP tanh per row) ------
    d = jnp.tanh(0.5 * (l1 - l0))             # = p1 - p0, in (-1, 1)
    p1 = 0.5 * (1.0 + d)
    p0 = 0.5 * (1.0 - d)

    # Single store of both probability columns.
    tb = probs_ref.shape[0]
    col = lax.broadcasted_iota(jnp.int32, (tb, NUM_CLASSES), 1)
    probs_ref[...] = jnp.where(col == 0, p0, p1).astype(probs_ref.dtype)

    # ---- CrossEntropyLoss applied to the softmax *probabilities* ----------
    # nll_b = logsumexp(p0, p1) - p_{y_b} = log(1 + exp(d)) - y_b * d  (exact,
    # d in (-1,1) so no shift needed).  Vectorized label pick + pad masking.
    meta = meta_ref[...]
    valid = meta[:, 0:1]                       # 1.0 real rows, 0.0 padding
    yv = meta[:, 1:2]                          # label * valid  (0.0 / 1.0)
    softplus_d = jnp.log(1.0 + jnp.exp(d))
    tile_nll_sum = jnp.sum(valid * softplus_d - yv * d)               # scalar

    @pl.when(j == 0)
    def _():
        loss_ref[...] = jnp.zeros_like(loss_ref)

    loss_ref[...] += jnp.reshape(tile_nll_sum, loss_ref.shape)


def my_model_forward(x, labels, w, b, *, compute_dtype=jnp.float32):
    """x: (B, H) pooler output, labels: (B,) int, w: (H, 2), b: (2,).

    compute_dtype=jnp.bfloat16 halves HBM traffic for the x stream on
    v6e / v7x (the kernel upcasts to f32 after load, so it is also valid on
    v5e).  Default f32 keeps bit-level parity with the reference.
    """
    B, H = x.shape

    # ---- batch tiling (ragged-safe: pad to the tile, mask in-kernel) ------
    b_pad8 = _round_up(B, 8)
    if b_pad8 <= TILE_CAP:
        tile_rows = b_pad8
    else:
        tile_rows = TILE_CAP
        for t in range(TILE_CAP, 7, -8):       # largest 8-multiple divisor
            if b_pad8 % t == 0:
                tile_rows = t
                break
    b_pad = _round_up(B, tile_rows)
    pad = b_pad - B

    total_tiles = b_pad // tile_rows
    ncores = 2 if total_tiles % 2 == 0 else 1   # v7x megacore split; harmless on 1-TC chips
    tiles_per_core = total_tiles // ncores

    # ---- operands ----------------------------------------------------------
    x_c = x.astype(compute_dtype)
    if pad:
        x_c = jnp.pad(x_c, ((0, pad), (0, 0)))
    wt = w.astype(compute_dtype).T                               # (2, H)
    bias = b.astype(jnp.float32).reshape(NUM_CLASSES)

    valid = (jnp.arange(b_pad) < B).astype(jnp.float32)          # (b_pad,)
    labels_f = labels.astype(jnp.float32)
    if pad:
        labels_f = jnp.pad(labels_f, (0, pad))
    meta = jnp.stack([valid, labels_f * valid], axis=1)          # (b_pad, 2)

    # ---- VMEM budget (double-buffered x is the big term) -------------------
    itemsize = jnp.dtype(compute_dtype).itemsize
    est = (2 * tile_rows * H * itemsize          # x tiles (double-buffered)
           + 4 * tile_rows * 128 * 4             # meta + probs (lane-padded)
           + 2 * NUM_CLASSES * max(H, 128) * 4   # resident w^T
           + (1 << 20))
    vmem_limit = int(min(max(est, 32 * 1024 * 1024), 112 * 1024 * 1024))

    tile_idx = lambda c, j: (c * tiles_per_core + j, 0)

    probs_full, loss_parts = pl.pallas_call(
        classifier_kernel,
        grid=(ncores, tiles_per_core),
        in_specs=[
            pl.BlockSpec(memory_space=pltpu.MemorySpace.SMEM),            # bias (2,)
            pl.BlockSpec((tile_rows, NUM_CLASSES), tile_idx),             # meta tile
            pl.BlockSpec((tile_rows, H), tile_idx),                       # x tile
            pl.BlockSpec((NUM_CLASSES, H), lambda c, j: (0, 0)),          # w^T resident
        ],
        out_specs=(
            pl.BlockSpec((tile_rows, NUM_CLASSES), tile_idx),             # probs tile
            pl.BlockSpec((1, 1, 1), lambda c, j: (c, 0, 0)),              # per-core loss
        ),
        out_shape=(
            jax.ShapeDtypeStruct((b_pad, NUM_CLASSES), jnp.float32),
            jax.ShapeDtypeStruct((ncores, 1, 1), jnp.float32),
        ),
        compiler_params=pltpu.CompilerParams(
            dimension_semantics=("parallel", "arbitrary"),
            vmem_limit_bytes=vmem_limit,
        ),
    )(bias, meta, x_c, wt)

    probs = probs_full[:B] if pad else probs_full
    loss = jnp.sum(loss_parts) / B             # mean over the *true* batch
    return probs, loss


if __name__ == "__main__":
    # Small shapes consistent with the module: batch=8, hidden_size=32.
    batch, hidden = 8, 32

    key = jax.random.PRNGKey(0)
    k_x, k_w, k_b, k_y = jax.random.split(key, 4)

    # Synthetic BigBird pooler_output.
    x = jax.random.normal(k_x, (batch, hidden), dtype=jnp.float32)

    # Deterministic classifier params (nn.Linear(hidden_size, 2)): W (H, 2), b (2,)
    bound = 1.0 / jnp.sqrt(hidden)
    w = jax.random.uniform(k_w, (hidden, NUM_CLASSES), jnp.float32, -bound, bound)
    b = jax.random.uniform(k_b, (NUM_CLASSES,), jnp.float32, -bound, bound)

    labels = jax.random.randint(k_y, (batch,), 0, NUM_CLASSES, dtype=jnp.int32)

    probs, loss = my_model_forward(x, labels, w, b)
    jax.block_until_ready((probs, loss))

    # Pure-JAX reference check (same "softmax then CE" semantics as the module).
    logits_ref = x @ w + b
    probs_ref = jax.nn.softmax(logits_ref, axis=1)
    logp_ref = jax.nn.log_softmax(probs_ref, axis=1)
    loss_ref = -jnp.mean(logp_ref[jnp.arange(batch), labels])

    assert jnp.allclose(probs, probs_ref, atol=1e-4), "probs mismatch"
    assert jnp.allclose(loss, loss_ref, atol=1e-4), "loss mismatch"

    print("KERNEL_OK")
</pallas_src>

<mosaic_0001>
module attributes {stable_mosaic.version = 11 : i64} {
  func.func @classifier_kernel(%arg0: i32, %arg1: i32, %arg2: memref<2xf32, #tpu.memory_space<smem>>, %arg3: memref<8x2xf32, #tpu.memory_space<vmem>>, %arg4: memref<8x32xf32, #tpu.memory_space<vmem>>, %arg5: memref<2x32xf32, #tpu.memory_space<vmem>>, %arg6: memref<8x2xf32, #tpu.memory_space<vmem>>, %arg7: memref<1x1x1xf32, #tpu.memory_space<vmem>>) attributes {dimension_semantics = [#tpu.dimension_semantics<parallel>, #tpu.dimension_semantics<arbitrary>], iteration_bounds = array<i64: 1, 1>, scalar_prefetch = 0 : i64, scratch_operands = 0 : i64, tpu.core_type = #tpu.core_type<tc>, window_params = [{transform_indices = @transform_0, window_bounds = array<i64: 2>}, {transform_indices = @transform_1, window_bounds = array<i64: 8, 2>}, {transform_indices = @transform_2, window_bounds = array<i64: 8, 32>}, {pipeline_mode = #tpu.pipeline_mode<synchronous>, transform_indices = @transform_3, window_bounds = array<i64: 2, 32>}, {transform_indices = @transform_4, window_bounds = array<i64: 8, 2>}, {transform_indices = @transform_5, window_bounds = array<i64: 1, 1, 1>}]} {
    %c0 = arith.constant 0 : index
    %c0_0 = arith.constant 0 : index
    %0 = vector.load %arg4[%c0, %c0_0] : memref<8x32xf32, #tpu.memory_space<vmem>>, vector<8x32xf32>
    %c0_1 = arith.constant 0 : index
    %c0_2 = arith.constant 0 : index
    %1 = vector.load %arg5[%c0_1, %c0_2] : memref<2x32xf32, #tpu.memory_space<vmem>>, vector<1x32xf32>
    %c1 = arith.constant 1 : index
    %c0_3 = arith.constant 0 : index
    %2 = vector.load %arg5[%c1, %c0_3] : memref<2x32xf32, #tpu.memory_space<vmem>>, vector<1x32xf32>
    %3 = vector.broadcast %1 : vector<1x32xf32> to vector<8x32xf32>
    %4 = arith.mulf %0, %3 : vector<8x32xf32>
    %cst = arith.constant dense<0.000000e+00> : vector<8xf32>
    %5 = vector.multi_reduction <add>, %4, %cst [1] : vector<8x32xf32> to vector<8xf32>
    %6 = vector.shape_cast %5 : vector<8xf32> to vector<8x1xf32>
    %c0_4 = arith.constant 0 : index
    %7 = memref.load %arg2[%c0_4] : memref<2xf32, #tpu.memory_space<smem>>
    %8 = vector.broadcast %7 : f32 to vector<8x1xf32>
    %9 = arith.addf %6, %8 : vector<8x1xf32>
    %10 = vector.broadcast %2 : vector<1x32xf32> to vector<8x32xf32>
    %11 = arith.mulf %0, %10 : vector<8x32xf32>
    %cst_5 = arith.constant dense<0.000000e+00> : vector<8xf32>
    %12 = vector.multi_reduction <add>, %11, %cst_5 [1] : vector<8x32xf32> to vector<8xf32>
    %13 = vector.shape_cast %12 : vector<8xf32> to vector<8x1xf32>
    %c1_6 = arith.constant 1 : index
    %14 = memref.load %arg2[%c1_6] : memref<2xf32, #tpu.memory_space<smem>>
    %15 = vector.broadcast %14 : f32 to vector<8x1xf32>
    %16 = arith.addf %13, %15 : vector<8x1xf32>
    %17 = arith.subf %16, %9 : vector<8x1xf32>
    %cst_7 = arith.constant 5.000000e-01 : f32
    %18 = vector.broadcast %cst_7 : f32 to vector<8x1xf32>
    %19 = arith.mulf %18, %17 : vector<8x1xf32>
    %20 = math.tanh %19 : vector<8x1xf32>
    %cst_8 = arith.constant 1.000000e+00 : f32
    %21 = vector.broadcast %cst_8 : f32 to vector<8x1xf32>
    %22 = arith.addf %21, %20 : vector<8x1xf32>
    %cst_9 = arith.constant 5.000000e-01 : f32
    %23 = vector.broadcast %cst_9 : f32 to vector<8x1xf32>
    %24 = arith.mulf %23, %22 : vector<8x1xf32>
    %cst_10 = arith.constant 1.000000e+00 : f32
    %25 = vector.broadcast %cst_10 : f32 to vector<8x1xf32>
    %26 = arith.subf %25, %20 : vector<8x1xf32>
    %cst_11 = arith.constant 5.000000e-01 : f32
    %27 = vector.broadcast %cst_11 : f32 to vector<8x1xf32>
    %28 = arith.mulf %27, %26 : vector<8x1xf32>
    %29 = tpu.iota {dimensions = array<i32: 1>} : vector<8x2xi32>
    %c0_i32 = arith.constant 0 : i32
    %30 = vector.broadcast %c0_i32 : i32 to vector<8x2xi32>
    %31 = arith.cmpi eq, %29, %30 : vector<8x2xi32>
    %32 = vector.shape_cast %28 : vector<8x1xf32> to vector<8x1xf32>
    %33 = vector.broadcast %32 : vector<8x1xf32> to vector<8x2xf32>
    %34 = vector.shape_cast %24 : vector<8x1xf32> to vector<8x1xf32>
    %35 = vector.broadcast %34 : vector<8x1xf32> to vector<8x2xf32>
    %36 = arith.select %31, %33, %35 : vector<8x2xi1>, vector<8x2xf32>
    %c0_12 = arith.constant 0 : index
    %c0_13 = arith.constant 0 : index
    %37 = vector.load %arg6[%c0_12, %c0_13] : memref<8x2xf32, #tpu.memory_space<vmem>>, vector<8x2xf32>
    tpu.vector_store %arg6[%c0_12, %c0_13], %36 {strides = array<i32>} : memref<8x2xf32, #tpu.memory_space<vmem>>, vector<8x2xf32>,
    %c0_14 = arith.constant 0 : index
    %c0_15 = arith.constant 0 : index
    %38 = vector.load %arg3[%c0_14, %c0_15] : memref<8x2xf32, #tpu.memory_space<vmem>>, vector<8x2xf32>
    %39 = vector.extract_strided_slice %38 {offsets = [0, 0], sizes = [8, 1], strides = [1, 1]} : vector<8x2xf32> to vector<8x1xf32>
    %40 = vector.extract_strided_slice %38 {offsets = [0, 1], sizes = [8, 1], strides = [1, 1]} : vector<8x2xf32> to vector<8x1xf32>
    %41 = math.exp %20 : vector<8x1xf32>
    %cst_16 = arith.constant 1.000000e+00 : f32
    %42 = vector.broadcast %cst_16 : f32 to vector<8x1xf32>
    %43 = arith.addf %42, %41 : vector<8x1xf32>
    %44 = math.log %43 : vector<8x1xf32>
    %45 = arith.mulf %39, %44 : vector<8x1xf32>
    %46 = arith.mulf %40, %20 : vector<8x1xf32>
    %47 = arith.subf %45, %46 : vector<8x1xf32>
    %48 = vector.shape_cast %47 : vector<8x1xf32> to vector<1x8x1xf32>
    %cst_17 = arith.constant dense<0.000000e+00> : vector<1xf32>
    %49 = vector.multi_reduction <add>, %48, %cst_17 [1, 2] : vector<1x8x1xf32> to vector<1xf32>
    %50 = vector.shape_cast %49 : vector<1xf32> to vector<1x1x1xf32>
    %51 = vector.extract %50[0, 0, 0] : f32 from vector<1x1x1xf32>
    %c0_i32_18 = arith.constant 0 : i32
    %52 = arith.cmpi eq, %arg1, %c0_i32_18 : i32
    %53 = arith.extui %52 : i1 to i32
    %c0_i32_19 = arith.constant 0 : i32
    %54 = arith.cmpi ne, %53, %c0_i32_19 : i32
    scf.if %54 {
      %cst_26 = arith.constant 0.000000e+00 : f32
      %59 = vector.broadcast %cst_26 : f32 to vector<1x1x1xf32>
      %c0_27 = arith.constant 0 : index
      %c0_28 = arith.constant 0 : index
      %c0_29 = arith.constant 0 : index
      %60 = vector.load %arg7[%c0_27, %c0_28, %c0_29] : memref<1x1x1xf32, #tpu.memory_space<vmem>>, vector<1x1x1xf32>
      tpu.vector_store %arg7[%c0_27, %c0_28, %c0_29], %59 {strides = array<i32>} : memref<1x1x1xf32, #tpu.memory_space<vmem>>, vector<1x1x1xf32>,
    } else {
    }
    %c0_20 = arith.constant 0 : index
    %c0_21 = arith.constant 0 : index
    %c0_22 = arith.constant 0 : index
    %55 = vector.load %arg7[%c0_20, %c0_21, %c0_22] : memref<1x1x1xf32, #tpu.memory_space<vmem>>, vector<1x1x1xf32>
    %56 = vector.broadcast %51 : f32 to vector<1x1x1xf32>
    %57 = arith.addf %55, %56 : vector<1x1x1xf32>
    %c0_23 = arith.constant 0 : index
    %c0_24 = arith.constant 0 : index
    %c0_25 = arith.constant 0 : index
    %58 = vector.load %arg7[%c0_23, %c0_24, %c0_25] : memref<1x1x1xf32, #tpu.memory_space<vmem>>, vector<1x1x1xf32>
    tpu.vector_store %arg7[%c0_23, %c0_24, %c0_25], %57 {strides = array<i32>} : memref<1x1x1xf32, #tpu.memory_space<vmem>>, vector<1x1x1xf32>,
    return
  }
  func.func @transform_0(%arg0: i32, %arg1: i32) -> i32 {
    %c0_i32 = arith.constant 0 : i32
    %c0_i32_0 = arith.constant 0 : i32
    return %c0_i32 : i32
  }
  func.func @transform_1(%arg0: i32, %arg1: i32) -> (i32, i32) {
    %c1_i32 = arith.constant 1 : i32
    %0 = arith.muli %arg0, %c1_i32 : i32
    %1 = arith.addi %0, %arg1 : i32
    %c0_i32 = arith.constant 0 : i32
    %c0_i32_0 = arith.constant 0 : i32
    return %1, %c0_i32 : i32, i32
  }
  func.func @transform_2(%arg0: i32, %arg1: i32) -> (i32, i32) {
    %c1_i32 = arith.constant 1 : i32
    %0 = arith.muli %arg0, %c1_i32 : i32
    %1 = arith.addi %0, %arg1 : i32
    %c0_i32 = arith.constant 0 : i32
    %c0_i32_0 = arith.constant 0 : i32
    return %1, %c0_i32 : i32, i32
  }
  func.func @transform_3(%arg0: i32, %arg1: i32) -> (i32, i32) {
    %c0_i32 = arith.constant 0 : i32
    %c0_i32_0 = arith.constant 0 : i32
    %c0_i32_1 = arith.constant 0 : i32
    return %c0_i32, %c0_i32_0 : i32, i32
  }
  func.func @transform_4(%arg0: i32, %arg1: i32) -> (i32, i32) {
    %c1_i32 = arith.constant 1 : i32
    %0 = arith.muli %arg0, %c1_i32 : i32
    %1 = arith.addi %0, %arg1 : i32
    %c0_i32 = arith.constant 0 : i32
    %c0_i32_0 = arith.constant 0 : i32
    return %1, %c0_i32 : i32, i32
  }
  func.func @transform_5(%arg0: i32, %arg1: i32) -> (i32, i32, i32) {
    %c0_i32 = arith.constant 0 : i32
    %c0_i32_0 = arith.constant 0 : i32
    %c0_i32_1 = arith.constant 0 : i32
    return %arg0, %c0_i32, %c0_i32_0 : i32, i32, i32
  }
}

</mosaic_0001>

<llo_original>
// kernel: tpu_custom_call.1
$region0: #{tpu_custom_call.1}
  #allocation0 [shape = 'u32[]', space=smem, size = 0x4, offset = 0x4, fixed_abs, tag = 'smem constant byte address 0x4 - core index']
  #allocation1 [shape = 'u32[144,128]{1,0:T(1,128)}', space=vmem, size = 0x12000, scoped, tag = 'internal scratch']
  %s0 = inlined_call_operand.vmem [shape: f32[2], index: 0, kind: input, shape index: {}]
  %s1 = inlined_call_operand.vmem [shape: f32[8,2], index: 1, kind: input, shape index: {}]
  %s2 = inlined_call_operand.vmem [shape: f32[8,32], index: 2, kind: input, shape index: {}]
  %s3 = inlined_call_operand.vmem [shape: f32[2,32], index: 3, kind: input, shape index: {}]
  %s4 = inlined_call_operand.vmem [shape: f32[8,2], index: 4, kind: output, shape index: {0}]
  %s5 = inlined_call_operand.hbm [shape: f32[1,1,1], index: 5, kind: output, shape index: {1}]
  %6 = xla_tuple %s4, %s5
  %s7 = sld [smem:[#allocation0]]
  $region42: #{tpu_custom_call.1} parent=0
    _
  %s9 = ssub.s32 1, %s7
  %s10 = scalar_select 0, %s9, %s7
  $region1: #{tpu_custom_call.1} parent=0
    #allocation2 [shape = 'u8[512]{0}', space=smem, size = 0x200, scoped, tag = 'input window, operand 0, single buffered']
    #allocation3 [shape = 's32[1]{0}', space=sflag, size = 0x4, scoped, tag = 'scoped memory for tpu_custom_call.1']
    #allocation4 [shape = 's32[1]{0}', space=sflag, size = 0x4, scoped, tag = 'scoped memory for tpu_custom_call.1']
    #allocation5 [shape = 'u8[512]{0}', space=vmem, size = 0x400, scoped, tag = 'output window, operand 1, single buffered']
    %11 = vsyncpa [#allocation4], 0
    %12 = vsyncpa [#allocation3], 0
    // Predicated region
    $region2: #{tpu_custom_call.1} parent=1 // pred_check
      _
    $region3: #{tpu_custom_call.1} parent=1 // pred_check_branch
      %14 = sbr.rel (0) target = $region5
    $region4: #{tpu_custom_call.1} parent=1 // pred_region
      %s16 = ssub.s32 16, 16
      %17 = vsyncadd [#allocation4], %s16
      %s19 = sshll.u32 %s0, 4
      %s20 = int_to_ptr.vmem [resolvable:$true] %s19
      %22 = dma.vmem_to_smem %s20, 16, [#allocation2], [#allocation4]
    $region5: #{tpu_custom_call.1} parent=1 // pred_fallthru
      _
    // Predicated region
    $region6: #{tpu_custom_call.1} parent=1 // pred_check
      _
    $region7: #{tpu_custom_call.1} parent=1 // pred_check_branch
      %24 = sbr.rel (0) target = $region9
    $region8: #{tpu_custom_call.1} parent=1 // pred_region
      %s25 = sadd.s32 0, 0
      %p26 = scmp.lt.s32.totalorder %s25, 0
      %s27 = scalar_select %p26, %s25, 0
      %s28 = smul.addr %s27, 8
      %s29 = scalar_lea.vmem %s1, %s28
      %s30 = sadd.s32 0, 0
    $region9: #{tpu_custom_call.1} parent=1 // pred_fallthru
      _
    // Predicated region
    $region10: #{tpu_custom_call.1} parent=1 // pred_check
      _
    $region11: #{tpu_custom_call.1} parent=1 // pred_check_branch
      %32 = sbr.rel (0) target = $region13
    $region12: #{tpu_custom_call.1} parent=1 // pred_region
      %s33 = sadd.s32 0, 0
      %p34 = scmp.lt.s32.totalorder %s33, 0
      %s35 = scalar_select %p34, %s33, 0
      %s36 = smul.addr %s35, 8
      %s37 = scalar_lea.vmem %s2, %s36
      %s38 = sadd.s32 0, 0
    $region13: #{tpu_custom_call.1} parent=1 // pred_fallthru
      _
    // Predicated region
    $region14: #{tpu_custom_call.1} parent=1 // pred_check
      _
    $region15: #{tpu_custom_call.1} parent=1 // pred_check_branch
      %40 = sbr.rel (0) target = $region17
    $region16: #{tpu_custom_call.1} parent=1 // pred_region
      _
    $region17: #{tpu_custom_call.1} parent=1 // pred_fallthru
      _
    // Predicated region
    $region18: #{tpu_custom_call.1} parent=1 // pred_check
      _
    $region19: #{tpu_custom_call.1} parent=1 // pred_check_branch
      %42 = sbr.rel (0) target = $region21
    $region20: #{tpu_custom_call.1} parent=1 // pred_region
      %43 = dma.done [#allocation4], 16
    $region21: #{tpu_custom_call.1} parent=1 // pred_fallthru
      _
    %44 = sfence
    %s45 = sadd.s32 0, 0
    %p46 = scmp.lt.s32.totalorder %s45, 0
    %s47 = scalar_select %p46, %s45, 0
    %s48 = smul.addr %s47, 8
    %s49 = scalar_lea.vmem %s1, %s48
    %s50 = sadd.s32 0, 0
    %p51 = scmp.lt.s32.totalorder %s50, 0
    %s52 = scalar_select %p51, %s50, 0
    %s53 = smul.addr %s52, 8
    %s54 = scalar_lea.vmem %s2, %s53
    %s55 = sadd.s32 0, 0
    %p56 = scmp.lt.s32.totalorder %s55, 0
    %s57 = scalar_select %p56, %s55, 0
    %s58 = smul.addr %s57, 8
    %s59 = scalar_lea.vmem %s4, %s58
    %s60 = sadd.s32 0, 0
    %p61 = scmp.lt.s32.totalorder %s60, 0
    %s62 = scalar_select %p61, %s60, 0
    %s63 = smul.addr %s62, 8
    %s64 = scalar_lea.vmem %s1, %s63
    %s65 = sadd.s32 0, 0
    %s66 = sadd.s32 0, 0
    %p67 = scmp.lt.s32.totalorder %s66, 0
    %s68 = scalar_select %p67, %s66, 0
    %s69 = smul.addr %s68, 8
    %s70 = scalar_lea.vmem %s2, %s69
    %s71 = sadd.s32 0, 0
    %s72 = sadd.s32 0, 0
    %p73 = scmp.lt.s32.totalorder %s72, 0
    %s74 = scalar_select %p73, %s72, 0
    %s75 = smul.addr %s74, 8
    %s76 = scalar_lea.vmem %s4, %s75
    %s77 = sadd.s32 0, 0
    %v78 = vld [vmem:[%s70] sm:$0xff]
    %v79 = vld [vmem:[%s3] sm:$0x1]
    %v80 = vld [vmem:[%s3 + $0x1] sm:$0x1]
    %v81 = vlaneseq
    %v82 = vshrl.u32 %v81, 7
    %v83 = vsub.s32 0, %v82
    %v84 = vrot.slane %v79, %v83
    %v85 = vmul.f32 %v78, %v84
    %vm86 = vcmask 261120
    %v87 = vsel %vm86, %v85, 0.0
    %88 = vadd.xlane.f32.xlu0 %v87
    %v89 = vpop.xlane.xlu0 %88
    %s90 = sld [smem:[#allocation2]]
    %v91 = vstv %s90
    %v92 = vadd.f32 %v89, %v91
    %v93 = vlaneseq
    %v94 = vshrl.u32 %v93, 7
    %v95 = vsub.s32 0, %v94
    %v96 = vrot.slane %v80, %v95
    %v97 = vmul.f32 %v78, %v96
    %v98 = vsel %vm86, %v97, 0.0
    %99 = vadd.xlane.f32.xlu0 %v98
    %v100 = vpop.xlane.xlu0 %99
    %s101 = sld [smem:[#allocation2 + $0x1]]
    %v102 = vstv %s101
    %v103 = vadd.f32 %v100, %v102
    %v104 = vsub.f32 %v103, %v92
    %v105 = vmul.f32 %v104, 0.5
    %v106 = vtanh.pop %v105
    %v107 = vadd.f32 %v106, 1.0
    %v108 = vmul.f32 %v107, 0.5
    %v109 = vsub.f32 1.0, %v106
    %v110 = vmul.f32 %v109, 0.5
    %v111 = vlaneseq
    %v112 = vand.u32 %v111, 127
    %vm113 = vcmp.eq.s32.totalorder %v112, 0
    %v114 = vsel %vm113, %v110, %v108
    %vm115 = vcmask 15360
    %116 = vst.msk [vmem:[%s76] sm:$0xff] %vm115, %v114
    %v117 = vld [vmem:[%s64] sm:$0xff]
    %v118 = vmul.f32 %v106, 1.442695
    %v119 = vpow.pop %v118
    %v120 = vadd.f32 %v119, 1.0
    %v121 = vlog2.pop %v120
    %v122 = vmul.f32 %v121, 0.6931472
    %v123 = vmul.f32 %v117, %v122
    %v124 = vmul.f32 %v117, %v106
    %126 = vrot.lane.b32.xlu0 %v124, 127
    %v127 = vpop.permute.xlu0 %126
    %v129 = vsub.f32 %v123, %v127
    %vm130 = vcmask 7168
    %v131 = vsel %vm130, %v129, 0.0
    %132 = vadd.xlane.f32.xlu0 %v131
    %v133 = vpop.xlane.xlu0 %132
    %v134 = vrot.slane %v133, 4
    %v135 = vadd.f32 %v133, %v134
    %v136 = vrot.slane %v135, 2
    %v137 = vadd.f32 %v135, %v136
    %v138 = vrot.slane %v137, 1
    %v139 = vadd.f32 %v137, %v138
    %s140 = vtos %v139
    %p141 = scmp.eq.s32.totalorder 0, 0
    // Predicated region
    $region22: #{tpu_custom_call.1} parent=1 // pred_check
      %p142 = pneg %p141
    $region23: #{tpu_custom_call.1} parent=1 // pred_check_branch
      %144 = sbr.rel (%p142) target = $region25
    $region24: #{tpu_custom_call.1} parent=1 // pred_region
      %vm145 = vcmask 0
      %146 = vst.msk [vmem:[#allocation5] sm:$0x1] %vm145, 0.0
    $region25: #{tpu_custom_call.1} parent=1 // pred_fallthru
      _
    %v147 = vld [vmem:[#allocation5] sm:$0x1]
    %v148 = vstv %s140
    %v149 = vadd.f32 %v147, %v148
    %vm150 = vcmask 0
    %151 = vst.msk [vmem:[#allocation5] sm:$0x1] %vm150, %v149
    %s152 = sadd.s32 0, 0
    %p153 = scmp.lt.s32.totalorder %s152, 0
    %s154 = scalar_select %p153, %s152, 0
    %s155 = smul.addr %s154, 8
    %s156 = scalar_lea.vmem %s4, %s155
    // Predicated region
    $region26: #{tpu_custom_call.1} parent=1 // pred_check
      _
    $region27: #{tpu_custom_call.1} parent=1 // pred_check_branch
      %158 = sbr.rel (0) target = $region29
    $region28: #{tpu_custom_call.1} parent=1 // pred_region
      %s159 = sadd.s32 0, 0
    $region29: #{tpu_custom_call.1} parent=1 // pred_fallthru
      _
    // Predicated region
    $region30: #{tpu_custom_call.1} parent=1 // pred_check
      _
    $region31: #{tpu_custom_call.1} parent=1 // pred_check_branch
      %161 = sbr.rel (0) target = $region33
    $region32: #{tpu_custom_call.1} parent=1 // pred_region
      %s163 = ssub.s32 16, 16
      %164 = vsyncadd [#allocation3], %s163
      %s166 = sshll.u32 [#allocation5], 4
      %s167 = int_to_ptr.vmem [resolvable:$true] %s166
      %169 = dma.vmem_to_hbm [thread:$0]  %s167, 16, %s5, [#allocation3]
    $region33: #{tpu_custom_call.1} parent=1 // pred_fallthru
      _
    // Predicated region
    $region34: #{tpu_custom_call.1} parent=1 // pred_check
      _
    $region35: #{tpu_custom_call.1} parent=1 // pred_check_branch
      %171 = sbr.rel (0) target = $region37
    $region36: #{tpu_custom_call.1} parent=1 // pred_region
      %s172 = sadd.s32 0, 0
      %p173 = scmp.lt.s32.totalorder %s172, 0
      %s174 = scalar_select %p173, %s172, 0
      %s175 = smul.addr %s174, 8
      %s176 = scalar_lea.vmem %s4, %s175
    $region37: #{tpu_custom_call.1} parent=1 // pred_fallthru
      _
    // Predicated region
    $region38: #{tpu_custom_call.1} parent=1 // pred_check
      _
    $region39: #{tpu_custom_call.1} parent=1 // pred_check_branch
      %178 = sbr.rel (0) target = $region41
    $region40: #{tpu_custom_call.1} parent=1 // pred_region
      %179 = dma.done [#allocation3], 16
    $region41: #{tpu_custom_call.1} parent=1 // pred_fallthru
      _
    %180 = vsyncpa [#allocation3], 1
    %181 = vsyncpa [#allocation4], 1

</llo_original>
